<compile_context>
chip_gen: v7x
topology: tpu7x:2x2x1
jax: 0.10.0
libtpu: 0.0.40
codegen_flags: <defaults>
</compile_context>

<pallas_src>
import math

import jax
import jax.numpy as jnp
from jax.experimental import pallas as pl
from jax.experimental.pallas import tpu as pltpu

LANES = 128


def _chip_defaults():
    """(row_tile, n_parallel) tuned per TPU generation (HBM BW vs VMEM limit)."""
    kind = ""
    try:
        kind = jax.devices()[0].device_kind.lower()
    except Exception:
        pass
    if "v7" in kind:
        # 2 TensorCores, ~3.2 TB/s per TC, 32 MiB default scoped VMEM.
        return 8192, 2
    if "v6" in kind:
        # 1 TensorCore, ~1.4 TB/s, 32 MiB default scoped VMEM.
        return 8192, 1
    # v5e and unknown chips: 16 MiB default scoped VMEM -> 2 MiB input blocks.
    return 4096, 1


def _sublane_granularity(dtype):
    # f32 -> 8, bf16/f16 -> 16, int8/fp8 -> 32 (min sublane tile per dtype).
    return max(8, 32 // jnp.dtype(dtype).itemsize)


def _make_rmse_kernel(rows, row_tile, n_parallel, base, rem, any_masking):
    """All arguments are static Python ints / bools."""

    def fold(x):
        # (row_tile, 128) f32 -> (8, 128): group rows into native (8,128)
        # vregs and add them (free reshape + pure VPU adds, no XLU).
        return x.reshape(row_tile // 8, 8, LANES).sum(axis=0)

    def kernel(yhat_ref, y_ref, out_ref):
        if n_parallel > 1:
            c = pl.program_id(0)          # CORE_PARALLEL axis (one per TC)
            i = pl.program_id(1)          # reduction over this core's blocks
            blk = c * base + jnp.minimum(c, rem) + i   # nominal block index
        else:
            i = pl.program_id(0)
            blk = i

        # Output block index is constant along the reduction axis -> resident
        # VMEM accumulator; zero it on each core's first step.
        @pl.when(i == 0)
        def _():
            out_ref[...] = jnp.zeros_like(out_ref)

        d = yhat_ref[...].astype(jnp.float32) - y_ref[...].astype(jnp.float32)
        sq = d * d

        if any_masking:
            row0 = blk * row_tile
            is_edge = row0 + row_tile > rows

            @pl.when(is_edge)
            def _():
                # Partial last block (rows past `rows` hold garbage) or a
                # clamped redundant step (row0 >= rows): select those rows out.
                local = jax.lax.broadcasted_iota(
                    jnp.int32, (row_tile, LANES), 0
                )
                out_ref[...] += fold(jnp.where(local < rows - row0, sq, 0.0))

            @pl.when(jnp.logical_not(is_edge))
            def _():
                out_ref[...] += fold(sq)
        else:
            out_ref[...] += fold(sq)

    return kernel


def rmse_loss(yhat, y, *, row_tile=None, n_parallel=None):
    """sqrt(mean((yhat - y)**2)) over all elements via a Pallas reduction."""
    assert yhat.shape == y.shape, "yhat and y must have the same shape"
    n = math.prod(yhat.shape)
    assert n > 0, "RMSE of an empty tensor is undefined"

    default_rt, default_np = _chip_defaults()
    if row_tile is None:
        row_tile = default_rt
    if n_parallel is None:
        n_parallel = default_np

    yhat_flat = yhat.reshape(-1)
    y_flat = y.reshape(-1)

    # Minimal tail pad only when n is not lane-aligned (zeros in BOTH inputs
    # contribute 0 to the squared-error sum).  No full-tile padding ever.
    if n % LANES:
        pad = LANES - (n % LANES)
        yhat_flat = jnp.pad(yhat_flat, (0, pad))
        y_flat = jnp.pad(y_flat, (0, pad))

    rows = yhat_flat.shape[0] // LANES
    yhat2d = yhat_flat.reshape(rows, LANES)
    y2d = y_flat.reshape(rows, LANES)

    # Round the row tile to the dtype-dependent sublane granularity and cap it
    # at the rounded-up slab height so small inputs use a single block.
    gran = max(_sublane_granularity(yhat.dtype), _sublane_granularity(y.dtype))
    row_tile = max(gran, (row_tile // gran) * gran)
    row_tile = min(row_tile, pl.cdiv(rows, gran) * gran)

    nblocks = pl.cdiv(rows, row_tile)
    # Contiguous floor/ceil split of blocks across cores.  The redundant-step
    # masking below assumes at most 2 cores (all current TPU generations).
    n_parallel = max(1, min(n_parallel, nblocks, 2))
    steps = pl.cdiv(nblocks, n_parallel)
    base = nblocks // n_parallel
    rem = nblocks % n_parallel

    # Mask only if some step covers rows past the real slab: a partial last
    # block and/or a single clamped redundant step on the last core.
    any_masking = (rows % row_tile != 0) or (n_parallel * steps != nblocks)

    kernel = _make_rmse_kernel(
        rows, row_tile, n_parallel, base, rem, any_masking
    )

    if n_parallel == 1:
        grid = (steps,)
        in_map = lambda i: (i, 0)                      # exact grid, no clamp
        out_map = lambda i: (0, 0)
        semantics = ("arbitrary",)
    else:
        grid = (n_parallel, steps)

        def in_map(c, i):
            blk = c * base + jnp.minimum(c, rem) + i
            return (jnp.minimum(blk, nblocks - 1), 0)  # clamp redundant step

        out_map = lambda c, i: (c, 0)
        semantics = (pltpu.CORE_PARALLEL, pltpu.ARBITRARY)

    partials = pl.pallas_call(
        kernel,
        out_shape=jax.ShapeDtypeStruct((n_parallel * 8, LANES), jnp.float32),
        grid_spec=pltpu.PrefetchScalarGridSpec(
            num_scalar_prefetch=0,
            grid=grid,
            in_specs=[
                pl.BlockSpec((row_tile, LANES), in_map),
                pl.BlockSpec((row_tile, LANES), in_map),
            ],
            out_specs=pl.BlockSpec((8, LANES), out_map),
        ),
        compiler_params=pltpu.CompilerParams(dimension_semantics=semantics),
    )(yhat2d, y2d)

    # Tiny follow-up: sum the per-core (8,128) partial sums, divide by the
    # true (unpadded) element count, then sqrt.
    return jnp.sqrt(jnp.sum(partials) / jnp.float32(n))


if __name__ == "__main__":
    key = jax.random.PRNGKey(0)
    k1, k2 = jax.random.split(key)

    # RMSELoss is shape-agnostic; exercise the flatten path with a 4-D tensor.
    shape = (2, 4, 16, 16)
    yhat = jax.random.normal(k1, shape, dtype=jnp.float32)
    y = jax.random.normal(k2, shape, dtype=jnp.float32)
    loss = jax.block_until_ready(rmse_loss(yhat, y))
    ref = jnp.sqrt(jnp.mean((yhat - y) ** 2))
    assert jnp.allclose(loss, ref, rtol=1e-5, atol=1e-6), (loss, ref)

    # Non-lane-aligned element count (tail pad + gated edge mask).
    shape2 = (3, 5, 7, 11)  # 1155 elements
    a = jax.random.normal(k1, shape2, dtype=jnp.float32)
    b = jax.random.normal(k2, shape2, dtype=jnp.float32)
    loss2 = jax.block_until_ready(rmse_loss(a, b))
    ref2 = jnp.sqrt(jnp.mean((a - b) ** 2))
    assert jnp.allclose(loss2, ref2, rtol=1e-5, atol=1e-6), (loss2, ref2)

    # bf16 inputs: exercises the 16-sublane granularity clamp and the
    # in-kernel f32 upcast (halves HBM traffic on this bandwidth-bound kernel).
    abf = a.astype(jnp.bfloat16)
    bbf = b.astype(jnp.bfloat16)
    loss3 = jax.block_until_ready(rmse_loss(abf, bbf))
    ref3 = jnp.sqrt(
        jnp.mean((abf.astype(jnp.float32) - bbf.astype(jnp.float32)) ** 2)
    )
    assert jnp.allclose(loss3, ref3, rtol=1e-5, atol=1e-6), (loss3, ref3)

    print("KERNEL_OK")
</pallas_src>

<mosaic_0001>
module attributes {stable_mosaic.version = 11 : i64} {
  func.func @kernel(%arg0: i32, %arg1: memref<16x128xf32, #tpu.memory_space<vmem>>, %arg2: memref<16x128xf32, #tpu.memory_space<vmem>>, %arg3: memref<8x128xf32, #tpu.memory_space<vmem>>) attributes {dimension_semantics = [#tpu.dimension_semantics<arbitrary>], iteration_bounds = array<i64: 1>, scalar_prefetch = 0 : i64, scratch_operands = 0 : i64, tpu.core_type = #tpu.core_type<tc>, window_params = [{transform_indices = @transform_0, window_bounds = array<i64: 16, 128>}, {transform_indices = @transform_1, window_bounds = array<i64: 16, 128>}, {pipeline_mode = #tpu.pipeline_mode<synchronous>, transform_indices = @transform_2, window_bounds = array<i64: 8, 128>}]} {
    %c0_i32 = arith.constant 0 : i32
    %0 = arith.cmpi eq, %arg0, %c0_i32 : i32
    %1 = arith.extui %0 : i1 to i32
    %c0_i32_0 = arith.constant 0 : i32
    %2 = arith.cmpi ne, %1, %c0_i32_0 : i32
    scf.if %2 {
      %cst_8 = arith.constant 0.000000e+00 : f32
      %12 = vector.broadcast %cst_8 : f32 to vector<8x128xf32>
      %c0_9 = arith.constant 0 : index
      %c0_10 = arith.constant 0 : index
      %13 = vector.load %arg3[%c0_9, %c0_10] : memref<8x128xf32, #tpu.memory_space<vmem>>, vector<8x128xf32>
      tpu.vector_store %arg3[%c0_9, %c0_10], %12 {strides = array<i32>} : memref<8x128xf32, #tpu.memory_space<vmem>>, vector<8x128xf32>,
    } else {
    }
    %c0 = arith.constant 0 : index
    %c0_1 = arith.constant 0 : index
    %3 = vector.load %arg1[%c0, %c0_1] : memref<16x128xf32, #tpu.memory_space<vmem>>, vector<16x128xf32>
    %c0_2 = arith.constant 0 : index
    %c0_3 = arith.constant 0 : index
    %4 = vector.load %arg2[%c0_2, %c0_3] : memref<16x128xf32, #tpu.memory_space<vmem>>, vector<16x128xf32>
    %5 = arith.subf %3, %4 : vector<16x128xf32>
    %6 = arith.mulf %5, %5 : vector<16x128xf32>
    %c0_4 = arith.constant 0 : index
    %c0_5 = arith.constant 0 : index
    %7 = vector.load %arg3[%c0_4, %c0_5] : memref<8x128xf32, #tpu.memory_space<vmem>>, vector<8x128xf32>
    %8 = vector.shape_cast %6 : vector<16x128xf32> to vector<2x8x128xf32>
    %cst = arith.constant dense<0.000000e+00> : vector<8x128xf32>
    %9 = vector.multi_reduction <add>, %8, %cst [0] : vector<2x8x128xf32> to vector<8x128xf32>
    %10 = arith.addf %7, %9 : vector<8x128xf32>
    %c0_6 = arith.constant 0 : index
    %c0_7 = arith.constant 0 : index
    %11 = vector.load %arg3[%c0_6, %c0_7] : memref<8x128xf32, #tpu.memory_space<vmem>>, vector<8x128xf32>
    tpu.vector_store %arg3[%c0_6, %c0_7], %10 {strides = array<i32>} : memref<8x128xf32, #tpu.memory_space<vmem>>, vector<8x128xf32>,
    return
  }
  func.func @transform_0(%arg0: i32) -> (i32, i32) {
    %c0_i32 = arith.constant 0 : i32
    %c0_i32_0 = arith.constant 0 : i32
    return %arg0, %c0_i32 : i32, i32
  }
  func.func @transform_1(%arg0: i32) -> (i32, i32) {
    %c0_i32 = arith.constant 0 : i32
    %c0_i32_0 = arith.constant 0 : i32
    return %arg0, %c0_i32 : i32, i32
  }
  func.func @transform_2(%arg0: i32) -> (i32, i32) {
    %c0_i32 = arith.constant 0 : i32
    %c0_i32_0 = arith.constant 0 : i32
    %c0_i32_1 = arith.constant 0 : i32
    return %c0_i32, %c0_i32_0 : i32, i32
  }
}

</mosaic_0001>

<llo_original>
// kernel: tpu_custom_call.1
$region0: #{tpu_custom_call.1}
  #allocation0 [shape = 'u32[]', space=smem, size = 0x4, offset = 0x4, fixed_abs, tag = 'smem constant byte address 0x4 - core index']
  #allocation1 [shape = 'u32[144,128]{1,0:T(1,128)}', space=vmem, size = 0x12000, scoped, tag = 'internal scratch']
  %s0 = inlined_call_operand.hbm [shape: f32[16,128], index: 0, kind: input, shape index: {}]
  %s1 = inlined_call_operand.hbm [shape: f32[16,128], index: 1, kind: input, shape index: {}]
  %s2 = inlined_call_operand.hbm [shape: f32[8,128], index: 2, kind: output, shape index: {}]
  %s3 = sld [smem:[#allocation0]]
  $region30: #{tpu_custom_call.1} parent=0
    _
  %s5 = ssub.s32 1, %s3
  %s6 = scalar_select 0, %s5, %s3
  $region1: #{tpu_custom_call.1} parent=0
    #allocation2 [shape = 'u8[8192]{0}', space=vmem, size = 0x2000, scoped, tag = 'input window, operand 0, single buffered']
    #allocation3 [shape = 's32[1]{0}', space=sflag, size = 0x4, scoped, tag = 'scoped memory for tpu_custom_call.1']
    #allocation4 [shape = 's32[1]{0}', space=sflag, size = 0x4, scoped, tag = 'scoped memory for tpu_custom_call.1']
    #allocation5 [shape = 'u8[8192]{0}', space=vmem, size = 0x2000, scoped, tag = 'input window, operand 1, single buffered']
    #allocation6 [shape = 's32[1]{0}', space=sflag, size = 0x4, scoped, tag = 'scoped memory for tpu_custom_call.1']
    #allocation7 [shape = 'u8[4096]{0}', space=vmem, size = 0x1000, scoped, tag = 'output window, operand 0, single buffered']
    %7 = vsyncpa [#allocation3], 0
    %8 = vsyncpa [#allocation6], 0
    %9 = vsyncpa [#allocation4], 0
    // Predicated region
    $region2: #{tpu_custom_call.1} parent=1 // pred_check
      _
    $region3: #{tpu_custom_call.1} parent=1 // pred_check_branch
      %11 = sbr.rel (0) target = $region5
    $region4: #{tpu_custom_call.1} parent=1 // pred_region
      %s13 = ssub.s32 256, 256
      %14 = vsyncadd [#allocation3], %s13
      %s15 = sshll.u32 [#allocation2], 4
      %s16 = int_to_ptr.vmem [resolvable:$true] %s15
      %21 = dma.hbm_to_vmem [thread:$0]  %s0, 256, %s16, [#allocation3], 128, 128, 8
    $region5: #{tpu_custom_call.1} parent=1 // pred_fallthru
      _
    // Predicated region
    $region6: #{tpu_custom_call.1} parent=1 // pred_check
      _
    $region7: #{tpu_custom_call.1} parent=1 // pred_check_branch
      %23 = sbr.rel (0) target = $region9
    $region8: #{tpu_custom_call.1} parent=1 // pred_region
      %s25 = ssub.s32 256, 256
      %26 = vsyncadd [#allocation6], %s25
      %s27 = sshll.u32 [#allocation5], 4
      %s28 = int_to_ptr.vmem [resolvable:$true] %s27
      %33 = dma.hbm_to_vmem [thread:$0]  %s1, 256, %s28, [#allocation6], 128, 128, 8
    $region9: #{tpu_custom_call.1} parent=1 // pred_fallthru
      _
    // Predicated region
    $region10: #{tpu_custom_call.1} parent=1 // pred_check
      _
    $region11: #{tpu_custom_call.1} parent=1 // pred_check_branch
      %35 = sbr.rel (0) target = $region13
    $region12: #{tpu_custom_call.1} parent=1 // pred_region
      %36 = dma.done [#allocation3], 256
    $region13: #{tpu_custom_call.1} parent=1 // pred_fallthru
      _
    // Predicated region
    $region14: #{tpu_custom_call.1} parent=1 // pred_check
      _
    $region15: #{tpu_custom_call.1} parent=1 // pred_check_branch
      %38 = sbr.rel (0) target = $region17
    $region16: #{tpu_custom_call.1} parent=1 // pred_region
      %39 = dma.done [#allocation6], 256
    $region17: #{tpu_custom_call.1} parent=1 // pred_fallthru
      _
    %p40 = scmp.eq.s32.totalorder 0, 0
    // Predicated region
    $region18: #{tpu_custom_call.1} parent=1 // pred_check
      %p41 = pneg %p40
    $region19: #{tpu_custom_call.1} parent=1 // pred_check_branch
      %43 = sbr.rel (%p41) target = $region21
    $region20: #{tpu_custom_call.1} parent=1 // pred_region
      %44 = vst [vmem:[#allocation7] sm:$0xff] 0.0
    $region21: #{tpu_custom_call.1} parent=1 // pred_fallthru
      _
    %v45 = vld [vmem:[#allocation2] sm:$0xff]
    %v46 = vld [vmem:[#allocation2 + $0x8] sm:$0xff]
    %v47 = vld [vmem:[#allocation5] sm:$0xff]
    %v48 = vld [vmem:[#allocation5 + $0x8] sm:$0xff]
    %v49 = vsub.f32 %v45, %v47
    %v50 = vsub.f32 %v46, %v48
    %v51 = vmul.f32 %v49, %v49
    %v52 = vmul.f32 %v50, %v50
    %v53 = vld [vmem:[#allocation7] sm:$0xff]
    %v54 = vadd.f32 %v51, %v52
    %v55 = vadd.f32 %v53, %v54
    %56 = vst [vmem:[#allocation7] sm:$0xff] %v55
    // Predicated region
    $region22: #{tpu_custom_call.1} parent=1 // pred_check
      _
    $region23: #{tpu_custom_call.1} parent=1 // pred_check_branch
      %58 = sbr.rel (0) target = $region25
    $region24: #{tpu_custom_call.1} parent=1 // pred_region
      %s60 = ssub.s32 128, 128
      %61 = vsyncadd [#allocation4], %s60
      %s63 = sshll.u32 [#allocation7], 4
      %s64 = int_to_ptr.vmem [resolvable:$true] %s63
      %66 = dma.vmem_to_hbm [thread:$0]  %s64, 128, %s2, [#allocation4]
    $region25: #{tpu_custom_call.1} parent=1 // pred_fallthru
      _
    // Predicated region
    $region26: #{tpu_custom_call.1} parent=1 // pred_check
      _
    $region27: #{tpu_custom_call.1} parent=1 // pred_check_branch
      %68 = sbr.rel (0) target = $region29
    $region28: #{tpu_custom_call.1} parent=1 // pred_region
      %69 = dma.done [#allocation4], 128
    $region29: #{tpu_custom_call.1} parent=1 // pred_fallthru
      _
    %70 = vsyncpa [#allocation3], 1
    %71 = vsyncpa [#allocation6], 1
    %72 = vsyncpa [#allocation4], 1

</llo_original>
